<compile_context>
chip_gen: v7x
topology: tpu7x:2x2x1
jax: 0.10.0
libtpu: 0.0.40
codegen_flags: <defaults>
</compile_context>

<pallas_src>
import functools

import numpy as np
import jax
import jax.numpy as jnp
from jax.experimental import pallas as pl
from jax.experimental.pallas import tpu as pltpu


def _round_up(x: int, m: int) -> int:
    return ((x + m - 1) // m) * m


@functools.lru_cache(maxsize=None)
def _bilinear_matrix_np(out_size: int, in_size: int) -> np.ndarray:
    """Row-stochastic (out_size, in_size) bilinear interpolation matrix.

    Matches torch bilinear resize with align_corners=False, antialias=False
    along one axis.
    """
    scale = in_size / out_size
    dst = np.arange(out_size, dtype=np.float64)
    src = np.clip((dst + 0.5) * scale - 0.5, 0.0, float(in_size - 1))
    i0 = np.floor(src).astype(np.int64)
    i1 = np.minimum(i0 + 1, in_size - 1)
    frac = (src - i0).astype(np.float32)
    m = np.zeros((out_size, in_size), dtype=np.float32)
    rows = np.arange(out_size)
    np.add.at(m, (rows, i0), 1.0 - frac)
    np.add.at(m, (rows, i1), frac)
    return m


@functools.lru_cache(maxsize=None)
def _folded_matrices(H: int, W: int, target_size: int):
    """Interpolation matrices with zero-padding folded in, contraction dims
    padded for TPU alignment (extra entries are exactly zero)."""
    T = target_size
    scale = T / max(W, H)
    new_w, new_h = int(W * scale), int(H * scale)
    # Quirky axis swap of the original module: TF.resize(image, (new_w, new_h))
    out_h, out_w = new_w, new_h
    pad_w = T - new_w                       # total padding on the height axis
    pad_h = T - new_h                       # total padding on the width axis
    left = pad_h // 2
    top = pad_w // 2

    Hp = _round_up(H, 8)                    # f32 sublane alignment
    Wp = _round_up(W, 128)                  # lane alignment

    rh = np.zeros((T, Hp), dtype=np.float32)          # padded output rows -> 0
    rh[top:top + out_h, :H] = _bilinear_matrix_np(out_h, H)

    rwt = np.zeros((Wp, T), dtype=np.float32)         # padded output cols -> 0
    rwt[:W, left:left + out_w] = _bilinear_matrix_np(out_w, W).T

    # Contract the larger image axis first (FLOP-optimal:
    #   W-first total = T*Hp*(Wp+T),  H-first total = T*Wp*(Hp+T)).
    contract_w_first = Hp <= Wp
    return jnp.asarray(rh), jnp.asarray(rwt), Hp, Wp, contract_w_first


def _resize_pad_kernel(img_ref, rh_ref, rwt_ref, out_ref, *,
                       channels, hp, t, contract_w_first):
    # img_ref : (C*Hp, Wp)  zero-padded image, channels stacked along rows
    # rh_ref  : (T, Hp)     row-interp matrix  (output-row padding folded in)
    # rwt_ref : (Wp, T)     col-interp matrix^T (output-col padding folded in)
    # out_ref : (C*T, T)    channels stacked along rows
    rh = rh_ref[...]
    rwt = rwt_ref[...]
    if contract_w_first:
        # Single batched MXU pass over the lane-aligned K = Wp contraction
        # (all channels at once), then C tiny (T,Hp)x(Hp,T) matmuls.
        tmp = jnp.dot(img_ref[...], rwt,
                      preferred_element_type=jnp.float32)          # (C*Hp, T)
        for c in range(channels):                                  # static unroll
            res = jnp.dot(rh, tmp[c * hp:(c + 1) * hp, :],
                          preferred_element_type=jnp.float32)      # (T, T)
            out_ref[c * t:(c + 1) * t, :] = res.astype(out_ref.dtype)
    else:
        # Portrait images (Hp > Wp): contract H first per channel, then one
        # batched matmul over W and a single full store of all channels.
        rows = [jnp.dot(rh, img_ref[c * hp:(c + 1) * hp, :],
                        preferred_element_type=jnp.float32)
                for c in range(channels)]                           # each (T, Wp)
        big = jnp.concatenate(rows, axis=0)                         # (C*T, Wp)
        out_ref[...] = jnp.dot(big, rwt,
                               preferred_element_type=jnp.float32
                               ).astype(out_ref.dtype)


def resize_pad(image: jnp.ndarray, target_size: int = 192) -> jnp.ndarray:
    """JAX/Pallas equivalent of Resize_Pad.forward. image: (C, H, W) -> (C, T, T)."""
    C, H, W = image.shape
    T = target_size
    rh, rwt, Hp, Wp, contract_w_first = _folded_matrices(H, W, T)

    # Zero-pad the image to (Hp, Wp) and stack channels along rows; padded
    # rows/cols are zero (their matrix entries are zero too), so the result is
    # unchanged.  The reshape (C, Hp, Wp)->(C*Hp, Wp) is layout-free (Hp % 8 == 0).
    img = jnp.pad(image.astype(jnp.float32),
                  ((0, 0), (0, Hp - H), (0, Wp - W)))
    img2d = img.reshape(C * Hp, Wp)

    kernel = functools.partial(_resize_pad_kernel, channels=C, hp=Hp, t=T,
                               contract_w_first=contract_w_first)

    # Everything is loaded in one grid step; raise the scoped-VMEM limit only
    # if the (double-buffered) footprint needs it, and cap at 64 MiB (v7x).
    # TODO(synk): for frames whose footprint exceeds ~64 MiB, column-tile the
    # Wp axis with a real grid instead of loading the whole image at once.
    io_bytes = 4 * (C * Hp * Wp + T * Hp + Wp * T + C * T * T)
    vmem_need = 2 * io_bytes + (2 << 20)
    vmem_limit = None if vmem_need <= (32 << 20) else min(vmem_need, 64 << 20)

    out2d = pl.pallas_call(
        kernel,
        out_shape=jax.ShapeDtypeStruct((C * T, T), jnp.float32),
        grid_spec=pltpu.PrefetchScalarGridSpec(
            num_scalar_prefetch=0,
            grid=(1,),                       # single invocation: all channels
            in_specs=[
                pl.BlockSpec((C * Hp, Wp), lambda i: (0, 0)),
                pl.BlockSpec((T, Hp), lambda i: (0, 0)),
                pl.BlockSpec((Wp, T), lambda i: (0, 0)),
            ],
            out_specs=pl.BlockSpec((C * T, T), lambda i: (0, 0)),
        ),
        compiler_params=pltpu.CompilerParams(
            dimension_semantics=("arbitrary",),
            vmem_limit_bytes=vmem_limit,
        ),
    )(img2d, rh, rwt)
    return out2d.reshape(C, T, T)            # free: contiguous split of rows


def _reference(image: jnp.ndarray, target_size: int) -> jnp.ndarray:
    """Pure-JAX reference (resize then pad, no folding) for correctness."""
    C, H, W = image.shape
    scale = target_size / max(W, H)
    new_w, new_h = int(W * scale), int(H * scale)
    out_h, out_w = new_w, new_h
    rh = jnp.asarray(_bilinear_matrix_np(out_h, H))
    rw = jnp.asarray(_bilinear_matrix_np(out_w, W))
    resized = jnp.einsum("oh,chw,pw->cop", rh, image.astype(jnp.float32), rw)
    pad_w = target_size - new_w
    pad_h = target_size - new_h
    left, top = pad_h // 2, pad_w // 2
    return jnp.pad(
        resized,
        ((0, 0), (top, pad_w - top), (left, pad_h - left)),
        mode="constant",
    )


if __name__ == "__main__":
    key = jax.random.PRNGKey(0)
    target = 32

    # Case 1: landscape (W > H) -> exercises the "contract W first" branch
    # (upscale + asymmetric padding on the width axis).
    k1, k2 = jax.random.split(key)
    x1 = jax.random.uniform(k1, (3, 16, 24), dtype=jnp.float32)
    out1 = jax.block_until_ready(resize_pad(x1, target_size=target))
    ref1 = _reference(x1, target)
    assert out1.shape == (3, target, target), out1.shape
    err1 = float(jnp.max(jnp.abs(out1 - ref1)))
    assert err1 < 1e-4, err1

    # Case 2: portrait (H > W after alignment) -> exercises the "contract H
    # first" branch (downscale + asymmetric padding on the height axis).
    x2 = jax.random.uniform(k2, (3, 136, 24), dtype=jnp.float32)
    out2 = jax.block_until_ready(resize_pad(x2, target_size=target))
    ref2 = _reference(x2, target)
    assert out2.shape == (3, target, target), out2.shape
    err2 = float(jnp.max(jnp.abs(out2 - ref2)))
    assert err2 < 1e-4, err2

    print("KERNEL_OK")
</pallas_src>

<mosaic_0001>
module attributes {stable_mosaic.version = 11 : i64} {
  func.func @_resize_pad_kernel(%arg0: i32, %arg1: memref<48x128xf32, #tpu.memory_space<vmem>>, %arg2: memref<32x16xf32, #tpu.memory_space<vmem>>, %arg3: memref<128x32xf32, #tpu.memory_space<vmem>>, %arg4: memref<96x32xf32, #tpu.memory_space<vmem>>) attributes {dimension_semantics = [#tpu.dimension_semantics<arbitrary>], iteration_bounds = array<i64: 1>, scalar_prefetch = 0 : i64, scratch_operands = 0 : i64, tpu.core_type = #tpu.core_type<tc>, window_params = [{pipeline_mode = #tpu.pipeline_mode<synchronous>, transform_indices = @transform_0, window_bounds = array<i64: 48, 128>}, {pipeline_mode = #tpu.pipeline_mode<synchronous>, transform_indices = @transform_1, window_bounds = array<i64: 32, 16>}, {pipeline_mode = #tpu.pipeline_mode<synchronous>, transform_indices = @transform_2, window_bounds = array<i64: 128, 32>}, {pipeline_mode = #tpu.pipeline_mode<synchronous>, transform_indices = @transform_3, window_bounds = array<i64: 96, 32>}]} {
    %c0 = arith.constant 0 : index
    %c0_0 = arith.constant 0 : index
    %0 = vector.load %arg2[%c0, %c0_0] : memref<32x16xf32, #tpu.memory_space<vmem>>, vector<32x16xf32>
    %c0_1 = arith.constant 0 : index
    %c0_2 = arith.constant 0 : index
    %1 = vector.load %arg3[%c0_1, %c0_2] : memref<128x32xf32, #tpu.memory_space<vmem>>, vector<128x32xf32>
    %c0_3 = arith.constant 0 : index
    %c0_4 = arith.constant 0 : index
    %2 = vector.load %arg1[%c0_3, %c0_4] : memref<48x128xf32, #tpu.memory_space<vmem>>, vector<48x128xf32>
    %cst = arith.constant dense<0.000000e+00> : vector<48x32xf32>
    %3 = tpu.matmul %2, %1, %cst {dimension_numbers = #tpu.dot_dimension_numbers<[1], [0], [0], [1], [0, 0, 1, 1], [], []>} : vector<48x128xf32>, vector<128x32xf32>, vector<48x32xf32> -> vector<48x32xf32>
    %4 = vector.extract_strided_slice %3 {offsets = [0, 0], sizes = [16, 32], strides = [1, 1]} : vector<48x32xf32> to vector<16x32xf32>
    %cst_5 = arith.constant dense<0.000000e+00> : vector<32x32xf32>
    %5 = tpu.matmul %0, %4, %cst_5 {dimension_numbers = #tpu.dot_dimension_numbers<[1], [0], [0], [1], [0, 0, 1, 1], [], []>} : vector<32x16xf32>, vector<16x32xf32>, vector<32x32xf32> -> vector<32x32xf32>
    %c0_6 = arith.constant 0 : index
    %c0_7 = arith.constant 0 : index
    %6 = vector.load %arg4[%c0_6, %c0_7] : memref<96x32xf32, #tpu.memory_space<vmem>>, vector<32x32xf32>
    tpu.vector_store %arg4[%c0_6, %c0_7], %5 {strides = array<i32>} : memref<96x32xf32, #tpu.memory_space<vmem>>, vector<32x32xf32>,
    %7 = vector.extract_strided_slice %3 {offsets = [16, 0], sizes = [16, 32], strides = [1, 1]} : vector<48x32xf32> to vector<16x32xf32>
    %cst_8 = arith.constant dense<0.000000e+00> : vector<32x32xf32>
    %8 = tpu.matmul %0, %7, %cst_8 {dimension_numbers = #tpu.dot_dimension_numbers<[1], [0], [0], [1], [0, 0, 1, 1], [], []>} : vector<32x16xf32>, vector<16x32xf32>, vector<32x32xf32> -> vector<32x32xf32>
    %c32 = arith.constant 32 : index
    %c0_9 = arith.constant 0 : index
    %9 = vector.load %arg4[%c32, %c0_9] : memref<96x32xf32, #tpu.memory_space<vmem>>, vector<32x32xf32>
    tpu.vector_store %arg4[%c32, %c0_9], %8 {strides = array<i32>} : memref<96x32xf32, #tpu.memory_space<vmem>>, vector<32x32xf32>,
    %10 = vector.extract_strided_slice %3 {offsets = [32, 0], sizes = [16, 32], strides = [1, 1]} : vector<48x32xf32> to vector<16x32xf32>
    %cst_10 = arith.constant dense<0.000000e+00> : vector<32x32xf32>
    %11 = tpu.matmul %0, %10, %cst_10 {dimension_numbers = #tpu.dot_dimension_numbers<[1], [0], [0], [1], [0, 0, 1, 1], [], []>} : vector<32x16xf32>, vector<16x32xf32>, vector<32x32xf32> -> vector<32x32xf32>
    %c64 = arith.constant 64 : index
    %c0_11 = arith.constant 0 : index
    %12 = vector.load %arg4[%c64, %c0_11] : memref<96x32xf32, #tpu.memory_space<vmem>>, vector<32x32xf32>
    tpu.vector_store %arg4[%c64, %c0_11], %11 {strides = array<i32>} : memref<96x32xf32, #tpu.memory_space<vmem>>, vector<32x32xf32>,
    return
  }
  func.func @transform_0(%arg0: i32) -> (i32, i32) {
    %c0_i32 = arith.constant 0 : i32
    %c0_i32_0 = arith.constant 0 : i32
    %c0_i32_1 = arith.constant 0 : i32
    return %c0_i32, %c0_i32_0 : i32, i32
  }
  func.func @transform_1(%arg0: i32) -> (i32, i32) {
    %c0_i32 = arith.constant 0 : i32
    %c0_i32_0 = arith.constant 0 : i32
    %c0_i32_1 = arith.constant 0 : i32
    return %c0_i32, %c0_i32_0 : i32, i32
  }
  func.func @transform_2(%arg0: i32) -> (i32, i32) {
    %c0_i32 = arith.constant 0 : i32
    %c0_i32_0 = arith.constant 0 : i32
    %c0_i32_1 = arith.constant 0 : i32
    return %c0_i32, %c0_i32_0 : i32, i32
  }
  func.func @transform_3(%arg0: i32) -> (i32, i32) {
    %c0_i32 = arith.constant 0 : i32
    %c0_i32_0 = arith.constant 0 : i32
    %c0_i32_1 = arith.constant 0 : i32
    return %c0_i32, %c0_i32_0 : i32, i32
  }
}

</mosaic_0001>

<llo_original>
// kernel: tpu_custom_call.1
$region0: #{tpu_custom_call.1}
  #allocation0 [shape = 'u32[]', space=smem, size = 0x4, offset = 0x4, fixed_abs, tag = 'smem constant byte address 0x4 - core index']
  #allocation1 [shape = 'u32[144,128]{1,0:T(1,128)}', space=vmem, size = 0x12000, scoped, tag = 'internal scratch']
  %s0 = inlined_call_operand.vmem [shape: f32[48,128], index: 0, kind: input, shape index: {}]
  %s1 = inlined_call_operand.vmem [shape: f32[32,16], index: 1, kind: input, shape index: {}]
  %s2 = inlined_call_operand.vmem [shape: f32[128,32], index: 2, kind: input, shape index: {}]
  %s3 = inlined_call_operand.vmem [shape: f32[96,32], index: 3, kind: output, shape index: {}]
  %s4 = sld [smem:[#allocation0]]
  $region22: #{tpu_custom_call.1} parent=0
    _
  %s6 = ssub.s32 1, %s4
  %s7 = scalar_select 0, %s6, %s4
  // Predicated region
  $region2: #{tpu_custom_call.1} parent=0 // pred_check
    _
  $region3: #{tpu_custom_call.1} parent=0 // pred_check_branch
    %9 = sbr.rel (0) target = $region5
  $region4: #{tpu_custom_call.1} parent=0 // pred_region
    _
  $region5: #{tpu_custom_call.1} parent=0 // pred_fallthru
    _
  // Predicated region
  $region6: #{tpu_custom_call.1} parent=0 // pred_check
    _
  $region7: #{tpu_custom_call.1} parent=0 // pred_check_branch
    %11 = sbr.rel (0) target = $region9
  $region8: #{tpu_custom_call.1} parent=0 // pred_region
    _
  $region9: #{tpu_custom_call.1} parent=0 // pred_fallthru
    _
  // Predicated region
  $region10: #{tpu_custom_call.1} parent=0 // pred_check
    _
  $region11: #{tpu_custom_call.1} parent=0 // pred_check_branch
    %13 = sbr.rel (0) target = $region13
  $region12: #{tpu_custom_call.1} parent=0 // pred_region
    _
  $region13: #{tpu_custom_call.1} parent=0 // pred_fallthru
    _
  %v14 = vld [vmem:[%s1] sm:$0xff]
  %v15 = vld [vmem:[%s1 + $0x8] sm:$0xff]
  %v16 = vld [vmem:[%s1 + $0x10] sm:$0xff]
  %v17 = vld [vmem:[%s1 + $0x18] sm:$0xff]
  %v18 = vld [vmem:[%s2] sm:$0xff]
  %v19 = vld [vmem:[%s2 + $0x8] sm:$0xff]
  %v20 = vld [vmem:[%s2 + $0x10] sm:$0xff]
  %v21 = vld [vmem:[%s2 + $0x18] sm:$0xff]
  %v22 = vld [vmem:[%s2 + $0x20] sm:$0xff]
  %v23 = vld [vmem:[%s2 + $0x28] sm:$0xff]
  %v24 = vld [vmem:[%s2 + $0x30] sm:$0xff]
  %v25 = vld [vmem:[%s2 + $0x38] sm:$0xff]
  %v26 = vld [vmem:[%s2 + $0x40] sm:$0xff]
  %v27 = vld [vmem:[%s2 + $0x48] sm:$0xff]
  %v28 = vld [vmem:[%s2 + $0x50] sm:$0xff]
  %v29 = vld [vmem:[%s2 + $0x58] sm:$0xff]
  %v30 = vld [vmem:[%s2 + $0x60] sm:$0xff]
  %v31 = vld [vmem:[%s2 + $0x68] sm:$0xff]
  %v32 = vld [vmem:[%s2 + $0x70] sm:$0xff]
  %v33 = vld [vmem:[%s2 + $0x78] sm:$0xff]
  %v34 = vld [vmem:[%s0] sm:$0xff]
  %v35 = vld [vmem:[%s0 + $0x8] sm:$0xff]
  %v36 = vld [vmem:[%s0 + $0x10] sm:$0xff]
  %v37 = vld [vmem:[%s0 + $0x18] sm:$0xff]
  %v38 = vld [vmem:[%s0 + $0x20] sm:$0xff]
  %v39 = vld [vmem:[%s0 + $0x28] sm:$0xff]
  %40 = vmatprep.subr.mxu0 0.0
  %41 = vmatpush1.msra.mxu0 %v18
  %42 = vmatprep.subr.mxu0 0.0
  %43 = vmatpush1.msra.mxu0 %v19
  %44 = vmatprep.subr.mxu0 0.0
  %45 = vmatpush1.msra.mxu0 %v20
  %46 = vmatprep.subr.mxu0 0.0
  %47 = vmatpush1.msra.mxu0 %v21
  %48 = vmatprep.subr.mxu0 0.0
  %49 = vmatpush1.msra.mxu0 %v22
  %50 = vmatprep.subr.mxu0 0.0
  %51 = vmatpush1.msra.mxu0 %v23
  %52 = vmatprep.subr.mxu0 0.0
  %53 = vmatpush1.msra.mxu0 %v24
  %54 = vmatprep.subr.mxu0 0.0
  %55 = vmatpush1.msra.mxu0 %v25
  %56 = vmatprep.subr.mxu0 0.0
  %57 = vmatpush1.msra.mxu0 %v26
  %58 = vmatprep.subr.mxu0 0.0
  %59 = vmatpush1.msra.mxu0 %v27
  %60 = vmatprep.subr.mxu0 0.0
  %61 = vmatpush1.msra.mxu0 %v28
  %62 = vmatprep.subr.mxu0 0.0
  %63 = vmatpush1.msra.mxu0 %v29
  %64 = vmatprep.subr.mxu0 0.0
  %65 = vmatpush1.msra.mxu0 %v30
  %66 = vmatprep.subr.mxu0 0.0
  %67 = vmatpush1.msra.mxu0 %v31
  %68 = vmatprep.subr.mxu0 0.0
  %69 = vmatpush1.msra.mxu0 %v32
  %70 = vmatprep.subr.mxu0 0.0
  %71 = vmatpush1.msra.mxu0 %v33
  %72 = vmatprep.subr.mxu0 0.0
  %73 = vmatpush1.msra.mxu0 0.0
  %74 = vmatprep.subr.mxu0 0.0
  %75 = vmatpush1.msra.mxu0 0.0
  %76 = vmatprep.subr.mxu0 0.0
  %77 = vmatpush1.msra.mxu0 0.0
  %78 = vmatprep.subr.mxu0 0.0
  %79 = vmatpush1.msra.mxu0 0.0
  %80 = vmatprep.subr.mxu0 0.0
  %81 = vmatpush1.msra.mxu0 0.0
  %82 = vmatprep.subr.mxu0 0.0
  %83 = vmatpush1.msra.mxu0 0.0
  %84 = vmatprep.subr.mxu0 0.0
  %85 = vmatpush1.msra.mxu0 0.0
  %86 = vmatprep.subr.mxu0 0.0
  %87 = vmatpush1.msra.mxu0 0.0
  %88 = vmatprep.subr.mxu0 0.0
  %89 = vmatpush1.msra.mxu0 0.0
  %90 = vmatprep.subr.mxu0 0.0
  %91 = vmatpush1.msra.mxu0 0.0
  %92 = vmatprep.subr.mxu0 0.0
  %93 = vmatpush1.msra.mxu0 0.0
  %94 = vmatprep.subr.mxu0 0.0
  %95 = vmatpush1.msra.mxu0 0.0
  %96 = vmatprep.subr.mxu0 0.0
  %97 = vmatpush1.msra.mxu0 0.0
  %98 = vmatprep.subr.mxu0 0.0
  %99 = vmatpush1.msra.mxu0 0.0
  %100 = vmatprep.subr.mxu0 0.0
  %101 = vmatpush1.msra.mxu0 0.0
  %102 = vmatprep.subr.mxu0 0.0
  %103 = vmatpush1.msra.mxu0 0.0
  %104 = vmatprep.mubr.f32.mxu0 0.0
  %105 = vmatmul.mubr.f32.gmra.mrb[0].mxu0 %v34
  %v106 = vpop.f32.mrb[0].mxu0
  %v107 = vadd.f32 0.0, %v106
  %v108 = vpop.f32.mrb[0].mxu0
  %109 = vmatprep.mubr.f32.mxu0 0.0
  %110 = vmatmul.mubr.f32.gmra.mrb[0].mxu0 %v35
  %v111 = vpop.f32.mrb[0].mxu0
  %v112 = vadd.f32 0.0, %v111
  %v113 = vpop.f32.mrb[0].mxu0
  %114 = vmatprep.mubr.f32.mxu0 0.0
  %115 = vmatmul.mubr.f32.gmra.mrb[0].mxu0 %v36
  %v116 = vpop.f32.mrb[0].mxu0
  %v117 = vadd.f32 0.0, %v116
  %v118 = vpop.f32.mrb[0].mxu0
  %119 = vmatprep.mubr.f32.mxu0 0.0
  %120 = vmatmul.mubr.f32.gmra.mrb[0].mxu0 %v37
  %v121 = vpop.f32.mrb[0].mxu0
  %v122 = vadd.f32 0.0, %v121
  %v123 = vpop.f32.mrb[0].mxu0
  %124 = vmatprep.mubr.f32.mxu0 0.0
  %125 = vmatmul.mubr.f32.gmra.mrb[0].mxu0 %v38
  %v126 = vpop.f32.mrb[0].mxu0
  %v127 = vadd.f32 0.0, %v126
  %v128 = vpop.f32.mrb[0].mxu0
  %129 = vmatprep.mubr.f32.mxu0 0.0
  %130 = vmatmul.mubr.f32.gmra.mrb[0].mxu0 %v39
  %v131 = vpop.f32.mrb[0].mxu0
  %v132 = vadd.f32 0.0, %v131
  %v133 = vpop.f32.mrb[0].mxu0
  %134 = vdwg.mxu0
  %vm135 = vcmask 130048
  %v137 = vsel %vm135, %v14, 0
  %v140 = vsel %vm135, %v15, 0
  %v143 = vsel %vm135, %v16, 0
  %v146 = vsel %vm135, %v17, 0
  %148 = vmatprep.subr.mxu0 0.0
  %149 = vmatpush1.msra.mxu0 %v107
  %150 = vmatprep.subr.mxu0 0.0
  %151 = vmatpush1.msra.mxu0 %v112
  %152 = vmatprep.subr.mxu0 0.0
  %153 = vmatpush1.msra.mxu0 0.0
  %154 = vmatprep.subr.mxu0 0.0
  %155 = vmatpush1.msra.mxu0 0.0
  %156 = vmatprep.subr.mxu0 0.0
  %157 = vmatpush1.msra.mxu0 0.0
  %158 = vmatprep.subr.mxu0 0.0
  %159 = vmatpush1.msra.mxu0 0.0
  %160 = vmatprep.subr.mxu0 0.0
  %161 = vmatpush1.msra.mxu0 0.0
  %162 = vmatprep.subr.mxu0 0.0
  %163 = vmatpush1.msra.mxu0 0.0
  %164 = vmatprep.subr.mxu0 0.0
  %165 = vmatpush1.msra.mxu0 0.0
  %166 = vmatprep.subr.mxu0 0.0
  %167 = vmatpush1.msra.mxu0 0.0
  %168 = vmatprep.subr.mxu0 0.0
  %169 = vmatpush1.msra.mxu0 0.0
  %170 = vmatprep.subr.mxu0 0.0
  %171 = vmatpush1.msra.mxu0 0.0
  %172 = vmatprep.subr.mxu0 0.0
  %173 = vmatpush1.msra.mxu0 0.0
  %174 = vmatprep.subr.mxu0 0.0
  %175 = vmatpush1.msra.mxu0 0.0
  %176 = vmatprep.subr.mxu0 0.0
  %177 = vmatpush1.msra.mxu0 0.0
  %178 = vmatprep.subr.mxu0 0.0
  %179 = vmatpush1.msra.mxu0 0.0
  %180 = vmatprep.subr.mxu0 0.0
  %181 = vmatpush1.msra.mxu0 0.0
  %182 = vmatprep.subr.mxu0 0.0
  %183 = vmatpush1.msra.mxu0 0.0
  %184 = vmatprep.subr.mxu0 0.0
  %185 = vmatpush1.msra.mxu0 0.0
  %186 = vmatprep.subr.mxu0 0.0
  %187 = vmatpush1.msra.mxu0 0.0
  %188 = vmatprep.subr.mxu0 0.0
  %189 = vmatpush1.msra.mxu0 0.0
  %190 = vmatprep.subr.mxu0 0.0
  %191 = vmatpush1.msra.mxu0 0.0
  %192 = vmatprep.subr.mxu0 0.0
  %193 = vmatpush1.msra.mxu0 0.0
  %194 = vmatprep.subr.mxu0 0.0
  %195 = vmatpush1.msra.mxu0 0.0
  %196 = vmatprep.subr.mxu0 0.0
  %197 = vmatpush1.msra.mxu0 0.0
  %198 = vmatprep.subr.mxu0 0.0
  %199 = vmatpush1.msra.mxu0 0.0
  %200 = vmatprep.subr.mxu0 0.0
  %201 = vmatpush1.msra.mxu0 0.0
  %202 = vmatprep.subr.mxu0 0.0
  %203 = vmatpush1.msra.mxu0 0.0
  %204 = vmatprep.subr.mxu0 0.0
  %205 = vmatpush1.msra.mxu0 0.0
  %206 = vmatprep.subr.mxu0 0.0
  %207 = vmatpush1.msra.mxu0 0.0
  %208 = vmatprep.subr.mxu0 0.0
  %209 = vmatpush1.msra.mxu0 0.0
  %210 = vmatprep.subr.mxu0 0.0
  %211 = vmatpush1.msra.mxu0 0.0
  %212 = vmatprep.mubr.f32.mxu0 0.0
  %213 = vmatmul.mubr.f32.gmra.mrb[0].mxu0 %v137
  %v214 = vpop.f32.mrb[0].mxu0
  %v215 = vadd.f32 0.0, %v214
  %v216 = vpop.f32.mrb[0].mxu0
  %217 = vmatprep.mubr.f32.mxu0 0.0
  %218 = vmatmul.mubr.f32.gmra.mrb[0].mxu0 %v140
  %v219 = vpop.f32.mrb[0].mxu0
  %v220 = vadd.f32 0.0, %v219
  %v221 = vpop.f32.mrb[0].mxu0
  %222 = vmatprep.mubr.f32.mxu0 0.0
  %223 = vmatmul.mubr.f32.gmra.mrb[0].mxu0 %v143
  %v224 = vpop.f32.mrb[0].mxu0
  %v225 = vadd.f32 0.0, %v224
  %v226 = vpop.f32.mrb[0].mxu0
  %227 = vmatprep.mubr.f32.mxu0 0.0
  %228 = vmatmul.mubr.f32.gmra.mrb[0].mxu0 %v146
  %v229 = vpop.f32.mrb[0].mxu0
  %v230 = vadd.f32 0.0, %v229
  %v231 = vpop.f32.mrb[0].mxu0
  %232 = vdwg.mxu0
  %vm233 = vcmask 261120
  %234 = vst.msk [vmem:[%s3] sm:$0xff] %vm233, %v215
  %235 = vst.msk [vmem:[%s3 + $0x8] sm:$0xff] %vm233, %v220
  %236 = vst.msk [vmem:[%s3 + $0x10] sm:$0xff] %vm233, %v225
  %237 = vst.msk [vmem:[%s3 + $0x18] sm:$0xff] %vm233, %v230
  %238 = vmatprep.subr.mxu0 0.0
  %239 = vmatpush1.msra.mxu0 %v117
  %240 = vmatprep.subr.mxu0 0.0
  %241 = vmatpush1.msra.mxu0 %v122
  %242 = vmatprep.subr.mxu0 0.0
  %243 = vmatpush1.msra.mxu0 0.0
  %244 = vmatprep.subr.mxu0 0.0
  %245 = vmatpush1.msra.mxu0 0.0
  %246 = vmatprep.subr.mxu0 0.0
  %247 = vmatpush1.msra.mxu0 0.0
  %248 = vmatprep.subr.mxu0 0.0
  %249 = vmatpush1.msra.mxu0 0.0
  %250 = vmatprep.subr.mxu0 0.0
  %251 = vmatpush1.msra.mxu0 0.0
  %252 = vmatprep.subr.mxu0 0.0
  %253 = vmatpush1.msra.mxu0 0.0
  %254 = vmatprep.subr.mxu0 0.0
  %255 = vmatpush1.msra.mxu0 0.0
  %256 = vmatprep.subr.mxu0 0.0
  %257 = vmatpush1.msra.mxu0 0.0
  %258 = vmatprep.subr.mxu0 0.0
  %259 = vmatpush1.msra.mxu0 0.0
  %260 = vmatprep.subr.mxu0 0.0
  %261 = vmatpush1.msra.mxu0 0.0
  %262 = vmatprep.subr.mxu0 0.0
  %263 = vmatpush1.msra.mxu0 0.0
  %264 = vmatprep.subr.mxu0 0.0
  %265 = vmatpush1.msra.mxu0 0.0
  %266 = vmatprep.subr.mxu0 0.0
  %267 = vmatpush1.msra.mxu0 0.0
  %268 = vmatprep.subr.mxu0 0.0
  %269 = vmatpush1.msra.mxu0 0.0
  %270 = vmatprep.subr.mxu0 0.0
  %271 = vmatpush1.msra.mxu0 0.0
  %272 = vmatprep.subr.mxu0 0.0
  %273 = vmatpush1.msra.mxu0 0.0
  %274 = vmatprep.subr.mxu0 0.0
  %275 = vmatpush1.msra.mxu0 0.0
  %276 = vmatprep.subr.mxu0 0.0
  %277 = vmatpush1.msra.mxu0 0.0
  %278 = vmatprep.subr.mxu0 0.0
  %279 = vmatpush1.msra.mxu0 0.0
  %280 = vmatprep.subr.mxu0 0.0
  %281 = vmatpush1.msra.mxu0 0.0
  %282 = vmatprep.subr.mxu0 0.0
  %283 = vmatpush1.msra.mxu0 0.0
  %284 = vmatprep.subr.mxu0 0.0
  %285 = vmatpush1.msra.mxu0 0.0
  %286 = vmatprep.subr.mxu0 0.0
  %287 = vmatpush1.msra.mxu0 0.0
  %288 = vmatprep.subr.mxu0 0.0
  %289 = vmatpush1.msra.mxu0 0.0
  %290 = vmatprep.subr.mxu0 0.0
  %291 = vmatpush1.msra.mxu0 0.0
  %292 = vmatprep.subr.mxu0 0.0
  %293 = vmatpush1.msra.mxu0 0.0
  %294 = vmatprep.subr.mxu0 0.0
  %295 = vmatpush1.msra.mxu0 0.0
  %296 = vmatprep.subr.mxu0 0.0
  %297 = vmatpush1.msra.mxu0 0.0
  %298 = vmatprep.subr.mxu0 0.0
  %299 = vmatpush1.msra.mxu0 0.0
  %300 = vmatprep.subr.mxu0 0.0
  %301 = vmatpush1.msra.mxu0 0.0
  %302 = vmatprep.mubr.f32.mxu0 0.0
  %303 = vmatmul.mubr.f32.gmra.mrb[0].mxu0 %v137
  %v304 = vpop.f32.mrb[0].mxu0
  %v305 = vadd.f32 0.0, %v304
  %v306 = vpop.f32.mrb[0].mxu0
  %307 = vmatprep.mubr.f32.mxu0 0.0
  %308 = vmatmul.mubr.f32.gmra.mrb[0].mxu0 %v140
  %v309 = vpop.f32.mrb[0].mxu0
  %v310 = vadd.f32 0.0, %v309
  %v311 = vpop.f32.mrb[0].mxu0
  %312 = vmatprep.mubr.f32.mxu0 0.0
  %313 = vmatmul.mubr.f32.gmra.mrb[0].mxu0 %v143
  %v314 = vpop.f32.mrb[0].mxu0
  %v315 = vadd.f32 0.0, %v314
  %v316 = vpop.f32.mrb[0].mxu0
  %317 = vmatprep.mubr.f32.mxu0 0.0
  %318 = vmatmul.mubr.f32.gmra.mrb[0].mxu0 %v146
  %v319 = vpop.f32.mrb[0].mxu0
  %v320 = vadd.f32 0.0, %v319
  %v321 = vpop.f32.mrb[0].mxu0
  %322 = vdwg.mxu0
  %323 = vst.msk [vmem:[%s3 + $0x20] sm:$0xff] %vm233, %v305
  %324 = vst.msk [vmem:[%s3 + $0x28] sm:$0xff] %vm233, %v310
  %325 = vst.msk [vmem:[%s3 + $0x30] sm:$0xff] %vm233, %v315
  %326 = vst.msk [vmem:[%s3 + $0x38] sm:$0xff] %vm233, %v320
  %327 = vmatprep.subr.mxu0 0.0
  %328 = vmatpush1.msra.mxu0 %v127
  %329 = vmatprep.subr.mxu0 0.0
  %330 = vmatpush1.msra.mxu0 %v132
  %331 = vmatprep.subr.mxu0 0.0
  %332 = vmatpush1.msra.mxu0 0.0
  %333 = vmatprep.subr.mxu0 0.0
  %334 = vmatpush1.msra.mxu0 0.0
  %335 = vmatprep.subr.mxu0 0.0
  %336 = vmatpush1.msra.mxu0 0.0
  %337 = vmatprep.subr.mxu0 0.0
  %338 = vmatpush1.msra.mxu0 0.0
  %339 = vmatprep.subr.mxu0 0.0
  %340 = vmatpush1.msra.mxu0 0.0
  %341 = vmatprep.subr.mxu0 0.0
  %342 = vmatpush1.msra.mxu0 0.0
  %343 = vmatprep.subr.mxu0 0.0
  %344 = vmatpush1.msra.mxu0 0.0
  %345 = vmatprep.subr.mxu0 0.0
  %346 = vmatpush1.msra.mxu0 0.0
  %347 = vmatprep.subr.mxu0 0.0
  %348 = vmatpush1.msra.mxu0 0.0
  %349 = vmatprep.subr.mxu0 0.0
  %350 = vmatpush1.msra.mxu0 0.0
  %351 = vmatprep.subr.mxu0 0.0
  %352 = vmatpush1.msra.mxu0 0.0
  %353 = vmatprep.subr.mxu0 0.0
  %354 = vmatpush1.msra.mxu0 0.0
  %355 = vmatprep.subr.mxu0 0.0
  %356 = vmatpush1.msra.mxu0 0.0
  %357 = vmatprep.subr.mxu0 0.0
  %358 = vmatpush1.msra.mxu0 0.0
  %359 = vmatprep.subr.mxu0 0.0
  %360 = vmatpush1.msra.mxu0 0.0
  %361 = vmatprep.subr.mxu0 0.0
  %362 = vmatpush1.msra.mxu0 0.0
  %363 = vmatprep.subr.mxu0 0.0
  %364 = vmatpush1.msra.mxu0 0.0
  %365 = vmatprep.subr.mxu0 0.0
  %366 = vmatpush1.msra.mxu0 0.0
  %367 = vmatprep.subr.mxu0 0.0
  %368 = vmatpush1.msra.mxu0 0.0
  %369 = vmatprep.subr.mxu0 0.0
  %370 = vmatpush1.msra.mxu0 0.0
  %371 = vmatprep.subr.mxu0 0.0
  %372 = vmatpush1.msra.mxu0 0.0
  %373 = vmatprep.subr.mxu0 0.0
  %374 = vmatpush1.msra.mxu0 0.0
  %375 = vmatprep.subr.mxu0 0.0
  %376 = vmatpush1.msra.mxu0 0.0
  %377 = vmatprep.subr.mxu0 0.0
  %378 = vmatpush1.msra.mxu0 0.0
  %379 = vmatprep.subr.mxu0 0.0
  %380 = vmatpush1.msra.mxu0 0.0
  %381 = vmatprep.subr.mxu0 0.0
  %382 = vmatpush1.msra.mxu0 0.0
  %383 = vmatprep.subr.mxu0 0.0
  %384 = vmatpush1.msra.mxu0 0.0
  %385 = vmatprep.subr.mxu0 0.0
  %386 = vmatpush1.msra.mxu0 0.0
  %387 = vmatprep.subr.mxu0 0.0
  %388 = vmatpush1.msra.mxu0 0.0
  %389 = vmatprep.subr.mxu0 0.0
  %390 = vmatpush1.msra.mxu0 0.0
  %391 = vmatprep.mubr.f32.mxu0 0.0
  %392 = vmatmul.mubr.f32.gmra.mrb[0].mxu0 %v137
  %v393 = vpop.f32.mrb[0].mxu0
  %v394 = vadd.f32 0.0, %v393
  %v395 = vpop.f32.mrb[0].mxu0
  %396 = vmatprep.mubr.f32.mxu0 0.0
  %397 = vmatmul.mubr.f32.gmra.mrb[0].mxu0 %v140
  %v398 = vpop.f32.mrb[0].mxu0
  %v399 = vadd.f32 0.0, %v398
  %v400 = vpop.f32.mrb[0].mxu0
  %401 = vmatprep.mubr.f32.mxu0 0.0
  %402 = vmatmul.mubr.f32.gmra.mrb[0].mxu0 %v143
  %v403 = vpop.f32.mrb[0].mxu0
  %v404 = vadd.f32 0.0, %v403
  %v405 = vpop.f32.mrb[0].mxu0
  %406 = vmatprep.mubr.f32.mxu0 0.0
  %407 = vmatmul.mubr.f32.gmra.mrb[0].mxu0 %v146
  %v408 = vpop.f32.mrb[0].mxu0
  %v409 = vadd.f32 0.0, %v408
  %v410 = vpop.f32.mrb[0].mxu0
  %411 = vdwg.mxu0
  %412 = vst.msk [vmem:[%s3 + $0x40] sm:$0xff] %vm233, %v394
  %413 = vst.msk [vmem:[%s3 + $0x48] sm:$0xff] %vm233, %v399
  %414 = vst.msk [vmem:[%s3 + $0x50] sm:$0xff] %vm233, %v404
  %415 = vst.msk [vmem:[%s3 + $0x58] sm:$0xff] %vm233, %v409
  // Predicated region
  $region14: #{tpu_custom_call.1} parent=0 // pred_check
    _
  $region15: #{tpu_custom_call.1} parent=0 // pred_check_branch
    %417 = sbr.rel (0) target = $region17
  $region16: #{tpu_custom_call.1} parent=0 // pred_region
    _
  $region17: #{tpu_custom_call.1} parent=0 // pred_fallthru
    _
  // Predicated region
  $region18: #{tpu_custom_call.1} parent=0 // pred_check
    _
  $region19: #{tpu_custom_call.1} parent=0 // pred_check_branch
    %419 = sbr.rel (0) target = $region21
  $region20: #{tpu_custom_call.1} parent=0 // pred_region
    _
  $region21: #{tpu_custom_call.1} parent=0 // pred_fallthru
    _

</llo_original>
